<compile_context>
chip_gen: v7x
topology: tpu7x:2x2x1
jax: 0.10.0
libtpu: 0.0.40
codegen_flags: <defaults>
</compile_context>

<pallas_src>
import functools

import jax
import jax.numpy as jnp
from jax.experimental import pallas as pl
from jax.experimental.pallas import tpu as pltpu


def _round_up(x, m):
    return (x + m - 1) // m * m


def _pick_tb(B, row_in, row_out, sub, cap):
    """Largest batch tile with bounded padding waste; prefer >=2 grid steps."""
    cands = [c for c in (1024, 512, 256, 128, 64, 32, 16, 8)
             if sub <= c <= cap and 2 * c * (row_in + row_out) * 4 <= (16 << 20)]
    if not cands:
        cands = [sub]
    allowed = B + max(sub - 1, B // 8)          # <= ~12.5% padded rows
    ok = [c for c in cands if _round_up(B, c) <= allowed]
    if not ok:
        ok = [cands[-1]]
    multi = [c for c in ok if -(-B // c) >= 2]  # at least 2 grid steps (v7x megacore)
    return multi[0] if multi else ok[0]


def _linear_kernel(x_ref, w_ref, b_ref, o_ref, *, compute_dtype):
    x = x_ref[...].astype(compute_dtype)
    w = w_ref[...].astype(compute_dtype)
    acc = jnp.dot(x, w, preferred_element_type=jnp.float32)
    o_ref[...] = (acc + b_ref[...].astype(jnp.float32)).astype(o_ref.dtype)


def _linear_kernel_ktiled(x_ref, w_ref, b_ref, o_ref, acc_ref, *, compute_dtype):
    k = pl.program_id(1)

    @pl.when(k == 0)
    def _():
        acc_ref[...] = jnp.zeros_like(acc_ref)

    x = x_ref[...].astype(compute_dtype)
    w = w_ref[...].astype(compute_dtype)
    acc_ref[...] += jnp.dot(x, w, preferred_element_type=jnp.float32)

    @pl.when(k == pl.num_programs(1) - 1)
    def _():
        o_ref[...] = (acc_ref[...] + b_ref[...].astype(jnp.float32)).astype(o_ref.dtype)


@functools.partial(jax.jit, static_argnames=("compute_dtype",))
def logistic_forward(x, w, b, *, compute_dtype=jnp.float32):
    """x: [B, in_dim], w: [in_dim, out_dim], b: [out_dim] -> [B, out_dim] f32."""
    B, Din = x.shape
    Din_w, Dout = w.shape
    assert Din_w == Din, "weight must be stored [in_dim, out_dim]"

    x_it = jnp.dtype(x.dtype).itemsize
    w_it = jnp.dtype(w.dtype).itemsize
    sub = 16 if x.dtype == jnp.bfloat16 else 8  # sublane quantum (bf16 packs 2/row)

    b2 = b.reshape(1, Dout).astype(jnp.float32)

    # Resident full-[Din, Dout] weight (double buffered) too big -> K-tile it.
    use_ktile = 2 * Din * Dout * w_it > (24 << 20)

    if not use_ktile:
        # ---- common path: one GEMM tile per grid step, weights VMEM-resident ----
        cap = 1024 if Din <= 512 else 512
        TB = _pick_tb(B, Din, Dout, sub, cap)
        B_p = _round_up(B, TB)
        x_p = x if B_p == B else jnp.pad(x, ((0, B_p - B), (0, 0)))

        blk = 2 * (TB * Din * x_it + Din * Dout * w_it + Dout * 4 + TB * Dout * 4)
        vmem_limit = int(min(max(blk + (1 << 20), 4 << 20), 48 << 20))
        cost = pl.CostEstimate(
            flops=2 * B_p * Din * Dout,
            transcendentals=0,
            bytes_accessed=B_p * Din * x_it + Din * Dout * w_it + Dout * 4
            + B_p * Dout * 4,
        )

        out = pl.pallas_call(
            functools.partial(_linear_kernel, compute_dtype=compute_dtype),
            out_shape=jax.ShapeDtypeStruct((B_p, Dout), jnp.float32),
            grid=(B_p // TB,),
            in_specs=[
                pl.BlockSpec((TB, Din), lambda i: (i, 0)),     # x tile per grid step
                pl.BlockSpec((Din, Dout), lambda i: (0, 0)),   # weights: VMEM-resident
                pl.BlockSpec((1, Dout), lambda i: (0, 0)),     # bias: VMEM-resident
            ],
            out_specs=pl.BlockSpec((TB, Dout), lambda i: (i, 0)),
            compiler_params=pltpu.CompilerParams(
                dimension_semantics=("parallel",),
                vmem_limit_bytes=vmem_limit,
            ),
            cost_estimate=cost,
        )(x_p, w, b2)
    else:
        # ---- large-layer fallback: K-tiled reduction with f32 accumulator ----
        # TODO(synk): add N (Dout) tiling for extremely large out_dim heads.
        tk_cap = max(128, ((12 << 20) // max(1, 2 * Dout * w_it)) // 128 * 128)
        TK = min(512, tk_cap, _round_up(Din, 128))
        Din_p = _round_up(Din, TK)
        TB = _pick_tb(B, TK, Dout, sub, 256)
        B_p = _round_up(B, TB)

        x_p = x
        if B_p != B or Din_p != Din:
            x_p = jnp.pad(x, ((0, B_p - B), (0, Din_p - Din)))
        w_p = w if Din_p == Din else jnp.pad(w, ((0, Din_p - Din), (0, 0)))

        blk = (2 * (TB * TK * x_it + TK * Dout * w_it + Dout * 4 + TB * Dout * 4)
               + TB * Dout * 4)
        vmem_limit = int(min(max(blk + (1 << 20), 4 << 20), 48 << 20))
        cost = pl.CostEstimate(
            flops=2 * B_p * Din_p * Dout,
            transcendentals=0,
            bytes_accessed=B_p * Din_p * x_it + (B_p // TB) * Din_p * Dout * w_it
            + Dout * 4 + B_p * Dout * 4,
        )

        out = pl.pallas_call(
            functools.partial(_linear_kernel_ktiled, compute_dtype=compute_dtype),
            out_shape=jax.ShapeDtypeStruct((B_p, Dout), jnp.float32),
            grid=(B_p // TB, Din_p // TK),
            in_specs=[
                pl.BlockSpec((TB, TK), lambda i, k: (i, k)),
                pl.BlockSpec((TK, Dout), lambda i, k: (k, 0)),
                pl.BlockSpec((1, Dout), lambda i, k: (0, 0)),
            ],
            out_specs=pl.BlockSpec((TB, Dout), lambda i, k: (i, 0)),
            scratch_shapes=[pltpu.VMEM((TB, Dout), jnp.float32)],
            compiler_params=pltpu.CompilerParams(
                dimension_semantics=("parallel", "arbitrary"),
                vmem_limit_bytes=vmem_limit,
            ),
            cost_estimate=cost,
        )(x_p, w_p, b2)

    return out if B_p == B else out[:B]


def _init_logistic(key, in_dim, out_dim):
    # Mimic the module's init: xavier_uniform weight, zero bias.
    # Stored [in_dim, out_dim] (transpose of PyTorch layout); xavier bound identical.
    bound = float(jnp.sqrt(6.0 / (in_dim + out_dim)))
    w = jax.random.uniform(key, (in_dim, out_dim), jnp.float32, -bound, bound)
    b = jnp.zeros((out_dim,), jnp.float32)
    return w, b


if __name__ == "__main__":
    B, in_dim, out_dim = 8, 64, 10
    key = jax.random.PRNGKey(0)
    kx, kw = jax.random.split(key)

    x = jax.random.normal(kx, (B, in_dim), jnp.float32)
    w, b = _init_logistic(kw, in_dim, out_dim)

    out = logistic_forward(x, w, b)
    out = jax.block_until_ready(out)

    ref = jnp.dot(x, w, precision=jax.lax.Precision.HIGHEST) + b
    assert out.shape == (B, out_dim)
    assert jnp.allclose(out, ref, atol=1e-2, rtol=1e-2), "mismatch vs JAX reference"
    print("KERNEL_OK")
</pallas_src>

<mosaic_0001>
module attributes {stable_mosaic.version = 11 : i64} {
  func.func @_linear_kernel(%arg0: i32, %arg1: memref<8x64xf32, #tpu.memory_space<vmem>>, %arg2: memref<64x10xf32, #tpu.memory_space<vmem>>, %arg3: memref<1x10xf32, #tpu.memory_space<vmem>>, %arg4: memref<8x10xf32, #tpu.memory_space<vmem>>) attributes {dimension_semantics = [#tpu.dimension_semantics<parallel>], iteration_bounds = array<i64: 1>, scalar_prefetch = 0 : i64, scratch_operands = 0 : i64, tpu.core_type = #tpu.core_type<tc>, window_params = [{transform_indices = @transform_0, window_bounds = array<i64: 8, 64>}, {pipeline_mode = #tpu.pipeline_mode<synchronous>, transform_indices = @transform_1, window_bounds = array<i64: 64, 10>}, {pipeline_mode = #tpu.pipeline_mode<synchronous>, transform_indices = @transform_2, window_bounds = array<i64: 1, 10>}, {transform_indices = @transform_3, window_bounds = array<i64: 8, 10>}]} {
    %c0 = arith.constant 0 : index
    %c0_0 = arith.constant 0 : index
    %0 = vector.load %arg1[%c0, %c0_0] : memref<8x64xf32, #tpu.memory_space<vmem>>, vector<8x64xf32>
    %c0_1 = arith.constant 0 : index
    %c0_2 = arith.constant 0 : index
    %1 = vector.load %arg2[%c0_1, %c0_2] : memref<64x10xf32, #tpu.memory_space<vmem>>, vector<64x10xf32>
    %cst = arith.constant dense<0.000000e+00> : vector<8x10xf32>
    %2 = tpu.matmul %0, %1, %cst {dimension_numbers = #tpu.dot_dimension_numbers<[1], [0], [0], [1], [0, 0, 1, 1], [], []>} : vector<8x64xf32>, vector<64x10xf32>, vector<8x10xf32> -> vector<8x10xf32>
    %c0_3 = arith.constant 0 : index
    %c0_4 = arith.constant 0 : index
    %3 = vector.load %arg3[%c0_3, %c0_4] : memref<1x10xf32, #tpu.memory_space<vmem>>, vector<1x10xf32>
    %4 = vector.broadcast %3 : vector<1x10xf32> to vector<8x10xf32>
    %5 = arith.addf %2, %4 : vector<8x10xf32>
    %c0_5 = arith.constant 0 : index
    %c0_6 = arith.constant 0 : index
    %6 = vector.load %arg4[%c0_5, %c0_6] : memref<8x10xf32, #tpu.memory_space<vmem>>, vector<8x10xf32>
    tpu.vector_store %arg4[%c0_5, %c0_6], %5 {strides = array<i32>} : memref<8x10xf32, #tpu.memory_space<vmem>>, vector<8x10xf32>,
    return
  }
  func.func @transform_0(%arg0: i32) -> (i32, i32) {
    %c0_i32 = arith.constant 0 : i32
    %c0_i32_0 = arith.constant 0 : i32
    return %arg0, %c0_i32 : i32, i32
  }
  func.func @transform_1(%arg0: i32) -> (i32, i32) {
    %c0_i32 = arith.constant 0 : i32
    %c0_i32_0 = arith.constant 0 : i32
    %c0_i32_1 = arith.constant 0 : i32
    return %c0_i32, %c0_i32_0 : i32, i32
  }
  func.func @transform_2(%arg0: i32) -> (i32, i32) {
    %c0_i32 = arith.constant 0 : i32
    %c0_i32_0 = arith.constant 0 : i32
    %c0_i32_1 = arith.constant 0 : i32
    return %c0_i32, %c0_i32_0 : i32, i32
  }
  func.func @transform_3(%arg0: i32) -> (i32, i32) {
    %c0_i32 = arith.constant 0 : i32
    %c0_i32_0 = arith.constant 0 : i32
    return %arg0, %c0_i32 : i32, i32
  }
}

</mosaic_0001>

<llo_original>
// kernel: logistic_forward.1
$region0: #{logistic_forward.1}
  #allocation0 [shape = 'u32[]', space=smem, size = 0x4, offset = 0x4, fixed_abs, tag = 'smem constant byte address 0x4 - core index']
  #allocation1 [shape = 'u32[144,128]{1,0:T(1,128)}', space=vmem, size = 0x12000, scoped, tag = 'internal scratch']
  %s0 = inlined_call_operand.vmem [shape: f32[8,64], index: 0, kind: input, shape index: {}]
  %s1 = inlined_call_operand.vmem [shape: f32[64,10], index: 1, kind: input, shape index: {}]
  %s2 = inlined_call_operand.vmem [shape: f32[1,10], index: 2, kind: input, shape index: {}]
  %s3 = inlined_call_operand.hbm [shape: f32[8,10], index: 3, kind: output, shape index: {}]
  %s4 = sld [smem:[#allocation0]]
  $region22: #{logistic_forward.1} parent=0
    _
  %s6 = ssub.s32 1, %s4
  %s7 = scalar_select 0, %s6, %s4
  $region1: #{logistic_forward.1} parent=0
    #allocation2 [shape = 'u8[4096]{0}', space=vmem, size = 0x1000, scoped, tag = 'output window, operand 0, single buffered']
    #allocation3 [shape = 's32[1]{0}', space=sflag, size = 0x4, scoped, tag = 'scoped memory for logistic_forward.1']
    %8 = vsyncpa [#allocation3], 0
    // Predicated region
    $region2: #{logistic_forward.1} parent=1 // pred_check
      _
    $region3: #{logistic_forward.1} parent=1 // pred_check_branch
      %10 = sbr.rel (0) target = $region5
    $region4: #{logistic_forward.1} parent=1 // pred_region
      _
    $region5: #{logistic_forward.1} parent=1 // pred_fallthru
      _
    // Predicated region
    $region6: #{logistic_forward.1} parent=1 // pred_check
      _
    $region7: #{logistic_forward.1} parent=1 // pred_check_branch
      %12 = sbr.rel (0) target = $region9
    $region8: #{logistic_forward.1} parent=1 // pred_region
      _
    $region9: #{logistic_forward.1} parent=1 // pred_fallthru
      _
    // Predicated region
    $region10: #{logistic_forward.1} parent=1 // pred_check
      _
    $region11: #{logistic_forward.1} parent=1 // pred_check_branch
      %14 = sbr.rel (0) target = $region13
    $region12: #{logistic_forward.1} parent=1 // pred_region
      _
    $region13: #{logistic_forward.1} parent=1 // pred_fallthru
      _
    %v15 = vld [vmem:[%s0] sm:$0xff]
    %v16 = vld [vmem:[%s1] sm:$0xff]
    %v17 = vld [vmem:[%s1 + $0x8] sm:$0xff]
    %v18 = vld [vmem:[%s1 + $0x10] sm:$0xff]
    %v19 = vld [vmem:[%s1 + $0x18] sm:$0xff]
    %v20 = vld [vmem:[%s1 + $0x20] sm:$0xff]
    %v21 = vld [vmem:[%s1 + $0x28] sm:$0xff]
    %v22 = vld [vmem:[%s1 + $0x30] sm:$0xff]
    %v23 = vld [vmem:[%s1 + $0x38] sm:$0xff]
    %v24 = vld [vmem:[%s2] sm:$0x1]
    %v26 = vlaneseq
    %v27 = vshrl.u32 %v26, 7
    %v28 = vsub.s32 0, %v27
    %v29 = vrot.slane %v24, %v28
    %vm31 = vcmask 523264
    %v33 = vsel %vm31, %v15, 0
    %35 = vmatprep.subr.mxu0 0.0
    %36 = vmatpush1.msra.mxu0 %v16
    %37 = vmatprep.subr.mxu0 0.0
    %38 = vmatpush1.msra.mxu0 %v17
    %39 = vmatprep.subr.mxu0 0.0
    %40 = vmatpush1.msra.mxu0 %v18
    %41 = vmatprep.subr.mxu0 0.0
    %42 = vmatpush1.msra.mxu0 %v19
    %43 = vmatprep.subr.mxu0 0.0
    %44 = vmatpush1.msra.mxu0 %v20
    %45 = vmatprep.subr.mxu0 0.0
    %46 = vmatpush1.msra.mxu0 %v21
    %47 = vmatprep.subr.mxu0 0.0
    %48 = vmatpush1.msra.mxu0 %v22
    %49 = vmatprep.subr.mxu0 0.0
    %50 = vmatpush1.msra.mxu0 %v23
    %51 = vmatprep.subr.mxu0 0.0
    %52 = vmatpush1.msra.mxu0 0.0
    %53 = vmatprep.subr.mxu0 0.0
    %54 = vmatpush1.msra.mxu0 0.0
    %55 = vmatprep.subr.mxu0 0.0
    %56 = vmatpush1.msra.mxu0 0.0
    %57 = vmatprep.subr.mxu0 0.0
    %58 = vmatpush1.msra.mxu0 0.0
    %59 = vmatprep.subr.mxu0 0.0
    %60 = vmatpush1.msra.mxu0 0.0
    %61 = vmatprep.subr.mxu0 0.0
    %62 = vmatpush1.msra.mxu0 0.0
    %63 = vmatprep.subr.mxu0 0.0
    %64 = vmatpush1.msra.mxu0 0.0
    %65 = vmatprep.subr.mxu0 0.0
    %66 = vmatpush1.msra.mxu0 0.0
    %67 = vmatprep.subr.mxu0 0.0
    %68 = vmatpush1.msra.mxu0 0.0
    %69 = vmatprep.subr.mxu0 0.0
    %70 = vmatpush1.msra.mxu0 0.0
    %71 = vmatprep.subr.mxu0 0.0
    %72 = vmatpush1.msra.mxu0 0.0
    %73 = vmatprep.subr.mxu0 0.0
    %74 = vmatpush1.msra.mxu0 0.0
    %75 = vmatprep.subr.mxu0 0.0
    %76 = vmatpush1.msra.mxu0 0.0
    %77 = vmatprep.subr.mxu0 0.0
    %78 = vmatpush1.msra.mxu0 0.0
    %79 = vmatprep.subr.mxu0 0.0
    %80 = vmatpush1.msra.mxu0 0.0
    %81 = vmatprep.subr.mxu0 0.0
    %82 = vmatpush1.msra.mxu0 0.0
    %83 = vmatprep.subr.mxu0 0.0
    %84 = vmatpush1.msra.mxu0 0.0
    %85 = vmatprep.subr.mxu0 0.0
    %86 = vmatpush1.msra.mxu0 0.0
    %87 = vmatprep.subr.mxu0 0.0
    %88 = vmatpush1.msra.mxu0 0.0
    %89 = vmatprep.subr.mxu0 0.0
    %90 = vmatpush1.msra.mxu0 0.0
    %91 = vmatprep.subr.mxu0 0.0
    %92 = vmatpush1.msra.mxu0 0.0
    %93 = vmatprep.subr.mxu0 0.0
    %94 = vmatpush1.msra.mxu0 0.0
    %95 = vmatprep.subr.mxu0 0.0
    %96 = vmatpush1.msra.mxu0 0.0
    %97 = vmatprep.subr.mxu0 0.0
    %98 = vmatpush1.msra.mxu0 0.0
    %99 = vmatprep.mubr.f32.mxu0 0.0
    %100 = vmatmul.mubr.f32.gmra.mrb[0].mxu0 %v33
    %v101 = vpop.f32.mrb[0].mxu0
    %v102 = vadd.f32 %v29, %v101
    %v103 = vpop.f32.mrb[0].mxu0
    %104 = vdwg.mxu0
    %vm105 = vcmask 80896
    %106 = vst.msk [vmem:[#allocation2] sm:$0xff] %vm105, %v102
    // Predicated region
    $region14: #{logistic_forward.1} parent=1 // pred_check
      _
    $region15: #{logistic_forward.1} parent=1 // pred_check_branch
      %108 = sbr.rel (0) target = $region17
    $region16: #{logistic_forward.1} parent=1 // pred_region
      %s110 = ssub.s32 128, 128
      %111 = vsyncadd [#allocation3], %s110
      %s113 = sshll.u32 [#allocation2], 4
      %s114 = int_to_ptr.vmem [resolvable:$true] %s113
      %116 = dma.vmem_to_hbm [thread:$0]  %s114, 128, %s3, [#allocation3]
    $region17: #{logistic_forward.1} parent=1 // pred_fallthru
      _
    // Predicated region
    $region18: #{logistic_forward.1} parent=1 // pred_check
      _
    $region19: #{logistic_forward.1} parent=1 // pred_check_branch
      %118 = sbr.rel (0) target = $region21
    $region20: #{logistic_forward.1} parent=1 // pred_region
      %119 = dma.done [#allocation3], 128
    $region21: #{logistic_forward.1} parent=1 // pred_fallthru
      _
    %120 = vsyncpa [#allocation3], 1

</llo_original>
